<compile_context>
chip_gen: v7x
topology: tpu7x:2x2x1
jax: 0.10.0
libtpu: 0.0.40
codegen_flags: <defaults>
</compile_context>

<pallas_src>
import jax
import jax.numpy as jnp
from jax.experimental import pallas as pl
from jax.experimental.pallas import tpu as pltpu


def _round_up(v, m):
    return -(-v // m) * m


# ----------------------------------------------------------------------------
# Conv3d as a plain tiled matmul over wrapper-side im2col patches.
#   p_ref: (TM, Kp)   rows = flattened (b, d, h, w) output positions
#   w_ref: (Kp, TN)   K = (kd, kh, kw, cin) taps + bias row, zero-padded
#   o_ref: (TM, TN)   conv output tile (rows, channels layout)
#   sum_ref / ssq_ref: (1, 1, TN) f32 per-tile channel sum / sum of squares
# ----------------------------------------------------------------------------
def _conv_mm_kernel(p_ref, w_ref, o_ref, sum_ref, ssq_ref):
    acc = jnp.dot(p_ref[...], w_ref[...], preferred_element_type=jnp.float32)
    o_ref[...] = acc.astype(o_ref.dtype)
    s = jnp.sum(acc, axis=0, keepdims=True)            # (1, TN)
    ss = jnp.sum(acc * acc, axis=0, keepdims=True)     # (1, TN)
    tn = s.shape[-1]
    sum_ref[...] = s.reshape(1, 1, tn)
    ssq_ref[...] = ss.reshape(1, 1, tn)


# ----------------------------------------------------------------------------
# GroupNorm + SiLU, purely elementwise: z = y * scale[c] + shift[c]; out = z*sigmoid(z)
# scale/shift already fold gamma, beta, mean and rsqrt(var+eps) per (batch, channel).
# ----------------------------------------------------------------------------
def _norm_act_kernel(y_ref, sc_ref, sh_ref, o_ref):
    y = y_ref[...].astype(jnp.float32)                 # chunk-sized f32 upcast only
    z = y * sc_ref[0] + sh_ref[0]                      # (TM, C) * (1, C) + (1, C)
    o_ref[...] = (z * jax.nn.sigmoid(z)).astype(o_ref.dtype)


# ----------------------------------------------------------------------------
# Wrapper: layout glue, im2col, parameter flattening, tiling / VMEM sizing.
# ----------------------------------------------------------------------------
def block_forward(x, conv_w, conv_b, gamma, beta, *, groups=8, frame_kernel_size=1):
    """x: (B, Cin, D, H, W) NCDHW; conv_w: (Cout, Cin, KF, 3, 3); conv_b/gamma/beta: (Cout,)."""
    B, Cin, D, H, W = x.shape
    Cout = conv_w.shape[0]
    KF = frame_kernel_size
    assert KF % 2 == 1, "frame_kernel_size must be odd for 'same' padding"
    assert Cout % groups == 0
    cg = Cout // groups
    pd = KF // 2
    eps = 1e-5
    dtype = x.dtype
    itemsize = jnp.dtype(dtype).itemsize

    # ---- wrapper-side im2col (XLA): kernel then sees a plain lane-dense matmul ----
    # TODO(synk): for large Cin replace the 9*KF x patch expansion with tap-wise
    # accumulation inside the kernel (acc += dot(shifted_view, w_tap)) to avoid the
    # im2col HBM blowup; and keep activations channels-last end-to-end (drop the
    # NCDHW transposes) when the surrounding graph allows.
    xl = jnp.transpose(x, (0, 2, 3, 4, 1))                          # (B, D, H, W, Cin)
    xp = jnp.pad(xl, ((0, 0), (pd, pd), (1, 1), (1, 1), (0, 0)))
    cols = []
    for kd in range(KF):
        for kh in range(3):
            for kw in range(3):
                cols.append(xp[:, kd:kd + D, kh:kh + H, kw:kw + W, :])
    K0 = KF * 9 * Cin
    Mb = D * H * W
    patches = jnp.concatenate(cols, axis=-1).reshape(B, Mb, K0).astype(dtype)
    ones = jnp.ones((B, Mb, 1), dtype)                              # bias column
    patches = jnp.concatenate([patches, ones], axis=-1)             # (B, Mb, K0+1)
    Kp = _round_up(K0 + 1, 128)                                     # MXU/lane aligned K
    if Kp != K0 + 1:
        patches = jnp.pad(patches, ((0, 0), (0, 0), (0, Kp - (K0 + 1))))

    # weights flattened in the same (kd, kh, kw, cin) order + bias row, zero-padded K
    w2 = jnp.transpose(conv_w, (2, 3, 4, 1, 0)).reshape(K0, Cout)
    w2 = jnp.concatenate([w2, conv_b.reshape(1, Cout)], axis=0)
    if Kp != K0 + 1:
        w2 = jnp.pad(w2, ((0, Kp - (K0 + 1)), (0, 0)))
    w2 = w2.astype(dtype)

    # ---- output-channel tile (MXU-friendly at production widths) ----
    if Cout % 128 == 0 and Cout > 256:
        TN = 256 if Cout % 256 == 0 else 128
    else:
        TN = Cout
    nct = Cout // TN
    TNpad = _round_up(TN, 128)

    # ---- row tile sized from the real (8,128)-padded in-kernel footprint ----
    try:
        vmem_cap = int(pltpu.get_tpu_info().vmem_capacity_bytes)
    except Exception:
        vmem_cap = 64 << 20
    vmem_cap_use = max(16 << 20, min(int(vmem_cap * 0.85), vmem_cap - (8 << 20)))

    fixed = 2 * Kp * TNpad * itemsize + 2 * 2 * 8 * TNpad * 4          # weights + stats (dbl-buf)
    per_row = 2 * Kp * itemsize + 2 * TNpad * itemsize + TNpad * 4     # patches + out + f32 acc
    budget = max(vmem_cap_use // 2 - fixed, 1 << 20)
    tm_rows = max(8, budget // per_row)
    tm_rows = min(tm_rows, max(8, (16 << 20) // (Kp * itemsize)))      # input tile <= ~16 MiB
    TM = min(_round_up(Mb, 8), (tm_rows // 8) * 8)
    TM = max(TM, 8)

    Mp = _round_up(Mb, TM)        # per-batch rows padded to a multiple of TM
    nrb = Mp // TM                # row tiles per batch element
    T = B * nrb                   # total row tiles (a tile never straddles a batch)

    if Mp != Mb:
        patches = jnp.pad(patches, ((0, 0), (0, Mp - Mb), (0, 0)))     # zero rows -> zero stats
    patches = patches.reshape(B * Mp, Kp)

    conv_vmem = int(min(vmem_cap_use, fixed + TM * per_row + (6 << 20)))
    conv_out, psum, pssq = pl.pallas_call(
        _conv_mm_kernel,
        out_shape=(
            jax.ShapeDtypeStruct((B * Mp, Cout), dtype),
            jax.ShapeDtypeStruct((T, 1, Cout), jnp.float32),
            jax.ShapeDtypeStruct((T, 1, Cout), jnp.float32),
        ),
        grid=(T, nct),
        in_specs=[
            pl.BlockSpec((TM, Kp), lambda t, j: (t, 0)),
            pl.BlockSpec((Kp, TN), lambda t, j: (0, j)),
        ],
        out_specs=(
            pl.BlockSpec((TM, TN), lambda t, j: (t, j)),
            pl.BlockSpec((1, 1, TN), lambda t, j: (t, 0, j)),
            pl.BlockSpec((1, 1, TN), lambda t, j: (t, 0, j)),
        ),
        compiler_params=pltpu.CompilerParams(
            dimension_semantics=("parallel", "parallel"),
            vmem_limit_bytes=conv_vmem),
    )(patches, w2)

    # ---- per-(batch, group) statistics: tiny XLA reduction, centered-var clamp ----
    ch_sum = jnp.sum(psum[:, 0, :].reshape(B, nrb, Cout), axis=1)      # (B, Cout)
    ch_ssq = jnp.sum(pssq[:, 0, :].reshape(B, nrb, Cout), axis=1)
    g_sum = jnp.sum(ch_sum.reshape(B, groups, cg), axis=-1)            # (B, G)
    g_ssq = jnp.sum(ch_ssq.reshape(B, groups, cg), axis=-1)
    n = float(Mb * cg)                                                 # true element count
    mean_g = g_sum / n
    var_g = jnp.maximum(g_ssq / n - mean_g * mean_g, 0.0)              # clamp >= 0
    inv_g = jax.lax.rsqrt(var_g + eps)
    mean_c = jnp.repeat(mean_g, cg, axis=1)                            # (B, Cout)
    inv_c = jnp.repeat(inv_g, cg, axis=1)
    scale_c = (gamma.reshape(1, Cout) * inv_c).astype(jnp.float32)
    shift_c = (beta.reshape(1, Cout) - mean_c * scale_c).astype(jnp.float32)
    scale_c = scale_c.reshape(B, 1, Cout)
    shift_c = shift_c.reshape(B, 1, Cout)

    # ---- GroupNorm + SiLU: elementwise, fully tiled, same (rows, C) layout ----
    Cpad = _round_up(Cout, 128)
    gn_fixed = 2 * 2 * 8 * Cpad * 4
    gn_per_row = 4 * Cpad * itemsize + Cpad * 4
    gn_vmem = int(min(vmem_cap_use, gn_fixed + TM * gn_per_row + (6 << 20)))

    act = pl.pallas_call(
        _norm_act_kernel,
        out_shape=jax.ShapeDtypeStruct((B * Mp, Cout), dtype),
        grid=(T,),
        in_specs=[
            pl.BlockSpec((TM, Cout), lambda t: (t, 0)),
            pl.BlockSpec((1, 1, Cout), lambda t: (t // nrb, 0, 0)),
            pl.BlockSpec((1, 1, Cout), lambda t: (t // nrb, 0, 0)),
        ],
        out_specs=pl.BlockSpec((TM, Cout), lambda t: (t, 0)),
        compiler_params=pltpu.CompilerParams(
            dimension_semantics=("parallel",), vmem_limit_bytes=gn_vmem),
    )(conv_out, scale_c, shift_c)

    y = act.reshape(B, Mp, Cout)[:, :Mb, :].reshape(B, D, H, W, Cout)
    return jnp.transpose(y, (0, 4, 1, 2, 3))                           # back to NCDHW


# ----------------------------------------------------------------------------
# Pure-JAX reference (numerical sanity check)
# ----------------------------------------------------------------------------
def _reference(x, conv_w, conv_b, gamma, beta, groups, kf):
    pad_d = kf // 2
    y = jax.lax.conv_general_dilated(
        x, conv_w, window_strides=(1, 1, 1),
        padding=((pad_d, pad_d), (1, 1), (1, 1)),
        dimension_numbers=("NCDHW", "OIDHW", "NCDHW"))
    y = y + conv_b.reshape(1, -1, 1, 1, 1)
    B, C, D, H, W = y.shape
    yg = y.reshape(B, groups, C // groups, D, H, W)
    mean = jnp.mean(yg, axis=(2, 3, 4, 5), keepdims=True)
    var = jnp.mean((yg - mean) ** 2, axis=(2, 3, 4, 5), keepdims=True)
    yn = ((yg - mean) / jnp.sqrt(var + 1e-5)).reshape(B, C, D, H, W)
    yn = yn * gamma.reshape(1, -1, 1, 1, 1) + beta.reshape(1, -1, 1, 1, 1)
    return yn * jax.nn.sigmoid(yn)


if __name__ == "__main__":
    # small shapes consistent with Block(dim=4, dim_out=16, groups=8, frame_kernel_size=1)
    B, Cin, Cout, D, H, W = 2, 4, 16, 3, 8, 8
    groups, KF = 8, 1

    key = jax.random.PRNGKey(0)
    k_x, k_w, k_b, k_g, k_bt = jax.random.split(key, 5)
    x = jax.random.normal(k_x, (B, Cin, D, H, W), jnp.float32)
    conv_w = 0.1 * jax.random.normal(k_w, (Cout, Cin, KF, 3, 3), jnp.float32)
    conv_b = 0.1 * jax.random.normal(k_b, (Cout,), jnp.float32)
    gamma = 1.0 + 0.1 * jax.random.normal(k_g, (Cout,), jnp.float32)
    beta = 0.1 * jax.random.normal(k_bt, (Cout,), jnp.float32)

    out = block_forward(x, conv_w, conv_b, gamma, beta,
                        groups=groups, frame_kernel_size=KF)
    out = jax.block_until_ready(out)

    ref = jax.block_until_ready(_reference(x, conv_w, conv_b, gamma, beta, groups, KF))
    assert out.shape == (B, Cout, D, H, W), out.shape
    err = float(jnp.max(jnp.abs(out - ref)))
    assert err < 2e-2, f"max abs error {err}"

    # TODO(synk): WeightStandardizedConv3d path (weight_standardize=True) not implemented;
    # default Block uses plain nn.Conv3d.
    print("KERNEL_OK")
</pallas_src>

<mosaic_0001>
module attributes {stable_mosaic.version = 11 : i64} {
  func.func @_conv_mm_kernel(%arg0: i32, %arg1: i32, %arg2: memref<192x128xf32, #tpu.memory_space<vmem>>, %arg3: memref<128x16xf32, #tpu.memory_space<vmem>>, %arg4: memref<192x16xf32, #tpu.memory_space<vmem>>, %arg5: memref<1x1x16xf32, #tpu.memory_space<vmem>>, %arg6: memref<1x1x16xf32, #tpu.memory_space<vmem>>) attributes {dimension_semantics = [#tpu.dimension_semantics<parallel>, #tpu.dimension_semantics<parallel>], iteration_bounds = array<i64: 2, 1>, scalar_prefetch = 0 : i64, scratch_operands = 0 : i64, tpu.core_type = #tpu.core_type<tc>, window_params = [{transform_indices = @transform_0, window_bounds = array<i64: 192, 128>}, {transform_indices = @transform_1, window_bounds = array<i64: 128, 16>}, {transform_indices = @transform_2, window_bounds = array<i64: 192, 16>}, {transform_indices = @transform_3, window_bounds = array<i64: 1, 1, 16>}, {transform_indices = @transform_4, window_bounds = array<i64: 1, 1, 16>}]} {
    %c0 = arith.constant 0 : index
    %c0_0 = arith.constant 0 : index
    %0 = vector.load %arg2[%c0, %c0_0] : memref<192x128xf32, #tpu.memory_space<vmem>>, vector<192x128xf32>
    %c0_1 = arith.constant 0 : index
    %c0_2 = arith.constant 0 : index
    %1 = vector.load %arg3[%c0_1, %c0_2] : memref<128x16xf32, #tpu.memory_space<vmem>>, vector<128x16xf32>
    %cst = arith.constant dense<0.000000e+00> : vector<192x16xf32>
    %2 = tpu.matmul %0, %1, %cst {dimension_numbers = #tpu.dot_dimension_numbers<[1], [0], [0], [1], [0, 0, 1, 1], [], []>} : vector<192x128xf32>, vector<128x16xf32>, vector<192x16xf32> -> vector<192x16xf32>
    %c0_3 = arith.constant 0 : index
    %c0_4 = arith.constant 0 : index
    %3 = vector.load %arg4[%c0_3, %c0_4] : memref<192x16xf32, #tpu.memory_space<vmem>>, vector<192x16xf32>
    tpu.vector_store %arg4[%c0_3, %c0_4], %2 {strides = array<i32>} : memref<192x16xf32, #tpu.memory_space<vmem>>, vector<192x16xf32>,
    %cst_5 = arith.constant dense<0.000000e+00> : vector<16xf32>
    %4 = vector.multi_reduction <add>, %2, %cst_5 [0] : vector<192x16xf32> to vector<16xf32>
    %5 = vector.shape_cast %4 : vector<16xf32> to vector<1x16xf32>
    %6 = arith.mulf %2, %2 : vector<192x16xf32>
    %cst_6 = arith.constant dense<0.000000e+00> : vector<16xf32>
    %7 = vector.multi_reduction <add>, %6, %cst_6 [0] : vector<192x16xf32> to vector<16xf32>
    %8 = vector.shape_cast %7 : vector<16xf32> to vector<1x16xf32>
    %9 = vector.shape_cast %5 : vector<1x16xf32> to vector<1x1x16xf32>
    %c0_7 = arith.constant 0 : index
    %c0_8 = arith.constant 0 : index
    %c0_9 = arith.constant 0 : index
    %10 = vector.load %arg5[%c0_7, %c0_8, %c0_9] : memref<1x1x16xf32, #tpu.memory_space<vmem>>, vector<1x1x16xf32>
    tpu.vector_store %arg5[%c0_7, %c0_8, %c0_9], %9 {strides = array<i32>} : memref<1x1x16xf32, #tpu.memory_space<vmem>>, vector<1x1x16xf32>,
    %11 = vector.shape_cast %8 : vector<1x16xf32> to vector<1x1x16xf32>
    %c0_10 = arith.constant 0 : index
    %c0_11 = arith.constant 0 : index
    %c0_12 = arith.constant 0 : index
    %12 = vector.load %arg6[%c0_10, %c0_11, %c0_12] : memref<1x1x16xf32, #tpu.memory_space<vmem>>, vector<1x1x16xf32>
    tpu.vector_store %arg6[%c0_10, %c0_11, %c0_12], %11 {strides = array<i32>} : memref<1x1x16xf32, #tpu.memory_space<vmem>>, vector<1x1x16xf32>,
    return
  }
  func.func @transform_0(%arg0: i32, %arg1: i32) -> (i32, i32) {
    %c0_i32 = arith.constant 0 : i32
    %c0_i32_0 = arith.constant 0 : i32
    return %arg0, %c0_i32 : i32, i32
  }
  func.func @transform_1(%arg0: i32, %arg1: i32) -> (i32, i32) {
    %c0_i32 = arith.constant 0 : i32
    %c0_i32_0 = arith.constant 0 : i32
    return %c0_i32, %arg1 : i32, i32
  }
  func.func @transform_2(%arg0: i32, %arg1: i32) -> (i32, i32) {
    %c0_i32 = arith.constant 0 : i32
    return %arg0, %arg1 : i32, i32
  }
  func.func @transform_3(%arg0: i32, %arg1: i32) -> (i32, i32, i32) {
    %c0_i32 = arith.constant 0 : i32
    %c0_i32_0 = arith.constant 0 : i32
    return %arg0, %c0_i32, %arg1 : i32, i32, i32
  }
  func.func @transform_4(%arg0: i32, %arg1: i32) -> (i32, i32, i32) {
    %c0_i32 = arith.constant 0 : i32
    %c0_i32_0 = arith.constant 0 : i32
    return %arg0, %c0_i32, %arg1 : i32, i32, i32
  }
}

</mosaic_0001>

<llo_original>
// kernel: tpu_custom_call.1
$region0: #{tpu_custom_call.1}
  #allocation0 [shape = 'u32[]', space=smem, size = 0x4, offset = 0x4, fixed_abs, tag = 'smem constant byte address 0x4 - core index']
  #allocation1 [shape = 'u32[144,128]{1,0:T(1,128)}', space=vmem, size = 0x12000, scoped, tag = 'internal scratch']
  %s0 = inlined_call_operand.hbm [shape: f32[384,128], index: 0, kind: input, shape index: {}]
  %s1 = inlined_call_operand.vmem [shape: f32[128,16], index: 1, kind: input, shape index: {}]
  %s2 = inlined_call_operand.vmem [shape: f32[384,16], index: 2, kind: output, shape index: {0}]
  %s3 = inlined_call_operand.hbm [shape: f32[2,1,16], index: 3, kind: output, shape index: {1}]
  %s4 = inlined_call_operand.hbm [shape: f32[2,1,16], index: 4, kind: output, shape index: {2}]
  %5 = xla_tuple %s2, %s3, %s4
  %s6 = sld [smem:[#allocation0]]
  $region61: #{tpu_custom_call.1} parent=0
    _
  %s8 = ssub.s32 1, %s6
  %s9 = scalar_select 0, %s8, %s6
  $region1: #{tpu_custom_call.1} parent=0
    #allocation2 [shape = 'u8[196608]{0}', space=vmem, size = 0x30000, scoped, tag = 'input window, operand 0']
    #allocation3 [shape = 's32[2]{0}', space=sflag, size = 0x8, scoped, tag = 'scoped memory for tpu_custom_call.1']
    #allocation4 [shape = 's32[2]{0}', space=sflag, size = 0x8, scoped, tag = 'scoped memory for tpu_custom_call.1']
    #allocation5 [shape = 'u8[1024]{0}', space=vmem, size = 0x400, scoped, tag = 'output window, operand 1']
    #allocation6 [shape = 'u8[1024]{0}', space=vmem, size = 0x400, scoped, tag = 'output window, operand 2']
    #allocation7 [shape = 's32[2]{0}', space=sflag, size = 0x8, scoped, tag = 'scoped memory for tpu_custom_call.1']
    %10 = vsyncpa [#allocation3], 0
    %s11 = scalar_lea.sflag [#allocation3], 1
    %12 = vsyncpa %s11, 0
    %13 = vsyncpa [#allocation4], 0
    %s14 = scalar_lea.sflag [#allocation4], 1
    %15 = vsyncpa %s14, 0
    %16 = vsyncpa [#allocation7], 0
    %s17 = scalar_lea.sflag [#allocation7], 1
    %18 = vsyncpa %s17, 0
    loop: start=0, step=1, limit=4
    $region2: #{tpu_custom_call.1} parent=1 // loop_pre_header
      _
    $region3: #{tpu_custom_call.1} parent=1 // loop_header
      %s20 = sphi 0, %s24
      %p21 = scmp.ge.s32.totalorder %s20, 4
      %s27 = sphi 0, %s39
      %s28 = sphi 0, %s35
      %s29 = sphi 0, %s27
      %s30 = sphi 0, %s28
      %s31 = sphi 0, %s29
      %s32 = sphi 0, %s30
      %s42 = sphi 0, %s44
      %s45 = sphi 0, %s42
      %s46 = sphi 0, %s45
      %s62 = sphi 0, %s46
      %s68 = sphi 0, %s70
      %s71 = sphi 0, %s68
      %s72 = sphi 0, %s71
      %s88 = sphi 0, %s72
      %s96 = sphi 0, %s98
      %s99 = sphi 0, %s96
      %s100 = sphi 0, %s99
      %s116 = sphi 0, %s100
      %s124 = sphi 0, %s126
      %s127 = sphi 0, %s124
      %s128 = sphi 0, %s127
      %s144 = sphi 0, %s128
      %s152 = sphi 0, %s154
      %s155 = sphi 0, %s152
      %s156 = sphi 0, %s155
      %s172 = sphi 0, %s156
    $region4: #{tpu_custom_call.1} parent=1 // loop_header_branch
      %23 = sbr.rel (%p21) target = $region8
    $region5: #{tpu_custom_call.1} parent=1 // loop_body
      %s25 = ssub.s32 %s20, 1
      %s26 = ssub.s32 %s20, 2
      %s33 = sadd.s32 1, %s28
      %p34 = scmp.ge.s32.totalorder %s33, 1
      %s35 = scalar_select %p34, 0, %s33
      %s36 = sadd.s32 1, %s27
      %s37 = scalar_select %p34, %s36, %s27
      %p38 = scmp.ge.s32.totalorder %s37, 2
      %s39 = scalar_select %p38, 0, %s37
      %s40 = ssub.s32 %s27, %s39
      %p41 = scmp.eq.s32.totalorder %s40, 0
      %s43 = sadd.s32 %s42, 1
      %s44 = scalar_select %p41, %s42, %s43
      %p47 = pneg %p41
      %p48 = scmp.eq.s32.totalorder %s20, 1
      %p49 = por %p47, %p48
      %p50 = scmp.ne.s32.totalorder %s42, %s45
      %p51 = scmp.eq.s32.totalorder %s20, 0
      %p52 = por %p50, %p51
      %p53 = scmp.ne.s32.totalorder %s42, %s45
      %p54 = scmp.eq.s32.totalorder %s25, 1
      %p55 = por %p53, %p54
      %p56 = scmp.ne.s32.totalorder %s45, %s46
      %p57 = scmp.eq.s32.totalorder %s25, 0
      %p58 = por %p56, %p57
      %p59 = scmp.ne.s32.totalorder %s45, %s46
      %p60 = scmp.eq.s32.totalorder %s26, 1
      %p61 = por %p59, %p60
      %p63 = scmp.ne.s32.totalorder %s46, %s62
      %p64 = scmp.eq.s32.totalorder %s26, 0
      %p65 = por %p63, %p64
      %s66 = ssub.s32 %s28, %s35
      %p67 = scmp.eq.s32.totalorder %s66, 0
      %s69 = sadd.s32 %s68, 1
      %s70 = scalar_select %p67, %s68, %s69
      %p73 = pneg %p67
      %p74 = scmp.eq.s32.totalorder %s20, 1
      %p75 = por %p73, %p74
      %p76 = scmp.ne.s32.totalorder %s68, %s71
      %p77 = scmp.eq.s32.totalorder %s20, 0
      %p78 = por %p76, %p77
      %p79 = scmp.ne.s32.totalorder %s68, %s71
      %p80 = scmp.eq.s32.totalorder %s25, 1
      %p81 = por %p79, %p80
      %p82 = scmp.ne.s32.totalorder %s71, %s72
      %p83 = scmp.eq.s32.totalorder %s25, 0
      %p84 = por %p82, %p83
      %p85 = scmp.ne.s32.totalorder %s71, %s72
      %p86 = scmp.eq.s32.totalorder %s26, 1
      %p87 = por %p85, %p86
      %p89 = scmp.ne.s32.totalorder %s72, %s88
      %p90 = scmp.eq.s32.totalorder %s26, 0
      %p91 = por %p89, %p90
      %s92 = ssub.s32 %s27, %s39
      %s93 = ssub.s32 %s28, %s35
      %s94 = sor.u32 %s92, %s93
      %p95 = scmp.eq.s32.totalorder %s94, 0
      %s97 = sadd.s32 %s96, 1
      %s98 = scalar_select %p95, %s96, %s97
      %p101 = pneg %p95
      %p102 = scmp.eq.s32.totalorder %s20, 1
      %p103 = por %p101, %p102
      %p104 = scmp.ne.s32.totalorder %s96, %s99
      %p105 = scmp.eq.s32.totalorder %s20, 0
      %p106 = por %p104, %p105
      %p107 = scmp.ne.s32.totalorder %s96, %s99
      %p108 = scmp.eq.s32.totalorder %s25, 1
      %p109 = por %p107, %p108
      %p110 = scmp.ne.s32.totalorder %s99, %s100
      %p111 = scmp.eq.s32.totalorder %s25, 0
      %p112 = por %p110, %p111
      %p113 = scmp.ne.s32.totalorder %s99, %s100
      %p114 = scmp.eq.s32.totalorder %s26, 1
      %p115 = por %p113, %p114
      %p117 = scmp.ne.s32.totalorder %s100, %s116
      %p118 = scmp.eq.s32.totalorder %s26, 0
      %p119 = por %p117, %p118
      %s120 = ssub.s32 %s27, %s39
      %s121 = ssub.s32 %s28, %s35
      %s122 = sor.u32 %s120, %s121
      %p123 = scmp.eq.s32.totalorder %s122, 0
      %s125 = sadd.s32 %s124, 1
      %s126 = scalar_select %p123, %s124, %s125
      %p129 = pneg %p123
      %p130 = scmp.eq.s32.totalorder %s20, 1
      %p131 = por %p129, %p130
      %p132 = scmp.ne.s32.totalorder %s124, %s127
      %p133 = scmp.eq.s32.totalorder %s20, 0
      %p134 = por %p132, %p133
      %p135 = scmp.ne.s32.totalorder %s124, %s127
      %p136 = scmp.eq.s32.totalorder %s25, 1
      %p137 = por %p135, %p136
      %p138 = scmp.ne.s32.totalorder %s127, %s128
      %p139 = scmp.eq.s32.totalorder %s25, 0
      %p140 = por %p138, %p139
      %p141 = scmp.ne.s32.totalorder %s127, %s128
      %p142 = scmp.eq.s32.totalorder %s26, 1
      %p143 = por %p141, %p142
      %p145 = scmp.ne.s32.totalorder %s128, %s144
      %p146 = scmp.eq.s32.totalorder %s26, 0
      %p147 = por %p145, %p146
      %s148 = ssub.s32 %s27, %s39
      %s149 = ssub.s32 %s28, %s35
      %s150 = sor.u32 %s148, %s149
      %p151 = scmp.eq.s32.totalorder %s150, 0
      %s153 = sadd.s32 %s152, 1
      %s154 = scalar_select %p151, %s152, %s153
      %p157 = pneg %p151
      %p158 = scmp.eq.s32.totalorder %s20, 1
      %p159 = por %p157, %p158
      %p160 = scmp.ne.s32.totalorder %s152, %s155
      %p161 = scmp.eq.s32.totalorder %s20, 0
      %p162 = por %p160, %p161
      %p163 = scmp.ne.s32.totalorder %s152, %s155
      %p164 = scmp.eq.s32.totalorder %s25, 1
      %p165 = por %p163, %p164
      %p166 = scmp.ne.s32.totalorder %s155, %s156
      %p167 = scmp.eq.s32.totalorder %s25, 0
      %p168 = por %p166, %p167
      %p169 = scmp.ne.s32.totalorder %s155, %s156
      %p170 = scmp.eq.s32.totalorder %s26, 1
      %p171 = por %p169, %p170
      %p173 = scmp.ne.s32.totalorder %s156, %s172
      %p174 = scmp.eq.s32.totalorder %s26, 0
      %p175 = por %p173, %p174
      %p176 = scmp.le.s32.totalorder 1, %s20
      %p177 = scmp.lt.s32.totalorder %s20, 3
      %p178 = pnand %p176, %p177
      %p179 = pneg %p178
      // Predicated region
      $region9: #{tpu_custom_call.1} parent=5 // pred_check
        _
      $region10: #{tpu_custom_call.1} parent=5 // pred_check_branch
        %181 = sbr.rel (%p178) target = $region12
      $region11: #{tpu_custom_call.1} parent=5 // pred_region
        %s182 = ssub.s32 %s20, 1
        // Predicated region
        $region13: #{tpu_custom_call.1} parent=11 // pred_check
          %p183 = pneg %p84
        $region14: #{tpu_custom_call.1} parent=11 // pred_check_branch
          %185 = sbr.rel (%p183) target = $region16
        $region15: #{tpu_custom_call.1} parent=11 // pred_region
          %p186 = scmp.lt.s32.totalorder %s30, 0
          %s187 = scalar_select %p186, %s30, 0
          %s188 = smul.addr %s187, 8
          %s189 = scalar_lea.vmem %s1, %s188
        $region16: #{tpu_custom_call.1} parent=11 // pred_fallthru
          _
      $region12: #{tpu_custom_call.1} parent=5 // pred_fallthru
        _
      %p190 = scmp.lt.s32.totalorder %s20, 2
      // Predicated region
      $region17: #{tpu_custom_call.1} parent=5 // pred_check
        %p191 = pneg %p190
      $region18: #{tpu_custom_call.1} parent=5 // pred_check_branch
        %193 = sbr.rel (%p191) target = $region20
      $region19: #{tpu_custom_call.1} parent=5 // pred_region
        // Predicated region
        $region21: #{tpu_custom_call.1} parent=19 // pred_check
          %p194 = pneg %p52
        $region22: #{tpu_custom_call.1} parent=19 // pred_check_branch
          %196 = sbr.rel (%p194) target = $region24
        $region23: #{tpu_custom_call.1} parent=19 // pred_region
          %s197 = sand.u32 %s42, 1
          %s198 = scalar_lea.sflag [#allocation3], %s197
          %s199 = sand.u32 %s42, 1
          %s200 = smul.addr %s199, 192
          %s201 = scalar_lea.vmem [#allocation2], %s200
          %s202 = smul.u32 24, %s27
          %s204 = ssub.s32 3072, 3072
          %205 = vsyncadd %s198, %s204
          %s206 = smul.addr %s202, 128
          %s207 = scalar_lea.hbm %s0, %s206
          %s208 = sshll.u32 %s201, 4
          %s209 = int_to_ptr.vmem [resolvable:$true] %s208
          %214 = dma.hbm_to_vmem [thread:$0]  %s207, 3072, %s209, %s198, 128, 128, 8
        $region24: #{tpu_custom_call.1} parent=19 // pred_fallthru
          _
      $region20: #{tpu_custom_call.1} parent=5 // pred_fallthru
        _
      %p215 = scmp.le.s32.totalorder 1, %s20
      %p216 = scmp.lt.s32.totalorder %s20, 3
      %p217 = pnand %p215, %p216
      %p218 = pneg %p217
      // Predicated region
      $region25: #{tpu_custom_call.1} parent=5 // pred_check
        _
      $region26: #{tpu_custom_call.1} parent=5 // pred_check_branch
        %220 = sbr.rel (%p217) target = $region28
      $region27: #{tpu_custom_call.1} parent=5 // pred_region
        %s221 = ssub.s32 %s20, 1
        %s222 = sand.u32 %s45, 1
        %s223 = scalar_lea.sflag [#allocation3], %s222
        %s224 = sand.u32 %s45, 1
        %s225 = smul.addr %s224, 192
        %s226 = scalar_lea.vmem [#allocation2], %s225
        // Predicated region
        $region29: #{tpu_custom_call.1} parent=27 // pred_check
          %p227 = pneg %p58
        $region30: #{tpu_custom_call.1} parent=27 // pred_check_branch
          %229 = sbr.rel (%p227) target = $region32
        $region31: #{tpu_custom_call.1} parent=27 // pred_region
          %230 = dma.done %s223, 3072
        $region32: #{tpu_custom_call.1} parent=27 // pred_fallthru
          _
        %s231 = sand.u32 %s45, 1
        %s232 = scalar_lea.sflag [#allocation3], %s231
        %s233 = sand.u32 %s45, 1
        %s234 = smul.addr %s233, 192
        %s235 = scalar_lea.vmem [#allocation2], %s234
        %p236 = pneg %p58
        %p237 = pneg %p55
        %p238 = scmp.lt.s32.totalorder %s30, 0
        %s239 = scalar_select %p238, %s30, 0
        %s240 = smul.addr %s239, 8
        %s241 = scalar_lea.vmem %s1, %s240
        %p242 = pneg %p84
        %p243 = pneg %p81
        %p244 = pneg %p112
        %p245 = pneg %p109
        %s246 = smul.u32 24, %s29
        %p247 = scmp.lt.s32.totalorder %s246, 47
        %s248 = scalar_select %p247, %s246, 47
        %p249 = scmp.lt.s32.totalorder %s30, 0
        %s250 = scalar_select %p249, %s30, 0
        %s251 = sadd.s32 %s250, %s248
        %s252 = smul.addr %s251, 8
        %s253 = scalar_lea.vmem %s2, %s252
        %p254 = pneg %p140
        %p255 = pneg %p137
        %s256 = sand.u32 %s127, 1
        %s257 = scalar_lea.sflag [#allocation4], %s256
        %s258 = sand.u32 %s127, 1
        %s259 = scalar_lea.vmem [#allocation5], %s258
        %p260 = pneg %p168
        %p261 = pneg %p165
        %s262 = sand.u32 %s155, 1
        %s263 = scalar_lea.sflag [#allocation7], %s262
        %s264 = sand.u32 %s155, 1
        %s265 = scalar_lea.vmem [#allocation6], %s264
        %s266 = smul.u32 24, %s29
        %p267 = scmp.lt.s32.totalorder %s30, 0
        %s268 = scalar_select %p267, %s30, 0
        %s269 = smul.addr %s268, 8
        %s270 = scalar_lea.vmem %s1, %s269
        %s271 = smul.u32 24, %s29
        %p272 = scmp.lt.s32.totalorder %s271, 47
        %s273 = scalar_select %p272, %s271, 47
        %p274 = scmp.lt.s32.totalorder %s30, 0
        %s275 = scalar_select %p274, %s30, 0
        %s276 = sadd.s32 %s275, %s273
        %s277 = smul.addr %s276, 8
        %s278 = scalar_lea.vmem %s2, %s277
        %s279 = smul.u32 24, %s29
        %v280 = vld [vmem:[%s226] sm:$0xff]
        %v281 = vld [vmem:[%s226 + $0x8] sm:$0xff]
        %v282 = vld [vmem:[%s226 + $0x10] sm:$0xff]
        %v283 = vld [vmem:[%s226 + $0x18] sm:$0xff]
        %v284 = vld [vmem:[%s226 + $0x20] sm:$0xff]
        %v285 = vld [vmem:[%s226 + $0x28] sm:$0xff]
        %v286 = vld [vmem:[%s226 + $0x30] sm:$0xff]
        %v287 = vld [vmem:[%s226 + $0x38] sm:$0xff]
        %v288 = vld [vmem:[%s226 + $0x40] sm:$0xff]
        %v289 = vld [vmem:[%s226 + $0x48] sm:$0xff]
        %v290 = vld [vmem:[%s226 + $0x50] sm:$0xff]
        %v291 = vld [vmem:[%s226 + $0x58] sm:$0xff]
        %v292 = vld [vmem:[%s226 + $0x60] sm:$0xff]
        %v293 = vld [vmem:[%s226 + $0x68] sm:$0xff]
        %v294 = vld [vmem:[%s226 + $0x70] sm:$0xff]
        %v295 = vld [vmem:[%s226 + $0x78] sm:$0xff]
        %v296 = vld [vmem:[%s226 + $0x80] sm:$0xff]
        %v297 = vld [vmem:[%s226 + $0x88] sm:$0xff]
        %v298 = vld [vmem:[%s226 + $0x90] sm:$0xff]
        %v299 = vld [vmem:[%s226 + $0x98] sm:$0xff]
        %v300 = vld [vmem:[%s226 + $0xa0] sm:$0xff]
        %v301 = vld [vmem:[%s226 + $0xa8] sm:$0xff]
        %v302 = vld [vmem:[%s226 + $0xb0] sm:$0xff]
        %v303 = vld [vmem:[%s226 + $0xb8] sm:$0xff]
        %v304 = vld [vmem:[%s270] sm:$0xff]
        %v305 = vld [vmem:[%s270 + $0x8] sm:$0xff]
        %v306 = vld [vmem:[%s270 + $0x10] sm:$0xff]
        %v307 = vld [vmem:[%s270 + $0x18] sm:$0xff]
        %v308 = vld [vmem:[%s270 + $0x20] sm:$0xff]
        %v309 = vld [vmem:[%s270 + $0x28] sm:$0xff]
        %v310 = vld [vmem:[%s270 + $0x30] sm:$0xff]
        %v311 = vld [vmem:[%s270 + $0x38] sm:$0xff]
        %v312 = vld [vmem:[%s270 + $0x40] sm:$0xff]
        %v313 = vld [vmem:[%s270 + $0x48] sm:$0xff]
        %v314 = vld [vmem:[%s270 + $0x50] sm:$0xff]
        %v315 = vld [vmem:[%s270 + $0x58] sm:$0xff]
        %v316 = vld [vmem:[%s270 + $0x60] sm:$0xff]
        %v317 = vld [vmem:[%s270 + $0x68] sm:$0xff]
        %v318 = vld [vmem:[%s270 + $0x70] sm:$0xff]
        %v319 = vld [vmem:[%s270 + $0x78] sm:$0xff]
        %320 = vmatprep.subr.mxu0 0.0
        %321 = vmatpush1.msra.mxu0 %v304
        %322 = vmatprep.subr.mxu0 0.0
        %323 = vmatpush1.msra.mxu0 %v305
        %324 = vmatprep.subr.mxu0 0.0
        %325 = vmatpush1.msra.mxu0 %v306
        %326 = vmatprep.subr.mxu0 0.0
        %327 = vmatpush1.msra.mxu0 %v307
        %328 = vmatprep.subr.mxu0 0.0
        %329 = vmatpush1.msra.mxu0 %v308
        %330 = vmatprep.subr.mxu0 0.0
        %331 = vmatpush1.msra.mxu0 %v309
        %332 = vmatprep.subr.mxu0 0.0
        %333 = vmatpush1.msra.mxu0 %v310
        %334 = vmatprep.subr.mxu0 0.0
        %335 = vmatpush1.msra.mxu0 %v311
        %336 = vmatprep.subr.mxu0 0.0
        %337 = vmatpush1.msra.mxu0 %v312
        %338 = vmatprep.subr.mxu0 0.0
        %339 = vmatpush1.msra.mxu0 %v313
        %340 = vmatprep.subr.mxu0 0.0
        %341 = vmatpush1.msra.mxu0 %v314
        %342 = vmatprep.subr.mxu0 0.0
        %343 = vmatpush1.msra.mxu0 %v315
        %344 = vmatprep.subr.mxu0 0.0
        %345 = vmatpush1.msra.mxu0 %v316
        %346 = vmatprep.subr.mxu0 0.0
        %347 = vmatpush1.msra.mxu0 %v317
        %348 = vmatprep.subr.mxu0 0.0
        %349 = vmatpush1.msra.mxu0 %v318
        %350 = vmatprep.subr.mxu0 0.0
        %351 = vmatpush1.msra.mxu0 %v319
        %352 = vmatprep.subr.mxu0 0.0
        %353 = vmatpush1.msra.mxu0 0.0
        %354 = vmatprep.subr.mxu0 0.0
        %355 = vmatpush1.msra.mxu0 0.0
        %356 = vmatprep.subr.mxu0 0.0
        %357 = vmatpush1.msra.mxu0 0.0
        %358 = vmatprep.subr.mxu0 0.0
        %359 = vmatpush1.msra.mxu0 0.0
        %360 = vmatprep.subr.mxu0 0.0
        %361 = vmatpush1.msra.mxu0 0.0
        %362 = vmatprep.subr.mxu0 0.0
        %363 = vmatpush1.msra.mxu0 0.0
        %364 = vmatprep.subr.mxu0 0.0
        %365 = vmatpush1.msra.mxu0 0.0
        %366 = vmatprep.subr.mxu0 0.0
        %367 = vmatpush1.msra.mxu0 0.0
        %368 = vmatprep.subr.mxu0 0.0
        %369 = vmatpush1.msra.mxu0 0.0
        %370 = vmatprep.subr.mxu0 0.0
        %371 = vmatpush1.msra.mxu0 0.0
        %372 = vmatprep.subr.mxu0 0.0
        %373 = vmatpush1.msra.mxu0 0.0
        %374 = vmatprep.subr.mxu0 0.0
        %375 = vmatpush1.msra.mxu0 0.0
        %376 = vmatprep.subr.mxu0 0.0
        %377 = vmatpush1.msra.mxu0 0.0
        %378 = vmatprep.subr.mxu0 0.0
        %379 = vmatpush1.msra.mxu0 0.0
        %380 = vmatprep.subr.mxu0 0.0
        %381 = vmatpush1.msra.mxu0 0.0
        %382 = vmatprep.subr.mxu0 0.0
        %383 = vmatpush1.msra.mxu0 0.0
        %384 = vmatprep.mubr.f32.mxu0 0.0
        %385 = vmatmul.mubr.f32.gmra.mrb[0].mxu0 %v280
        %v386 = vpop.f32.mrb[0].mxu0
        %v387 = vadd.f32 0.0, %v386
        %v388 = vpop.f32.mrb[0].mxu0
        %389 = vmatprep.mubr.f32.mxu0 0.0
        %390 = vmatmul.mubr.f32.gmra.mrb[0].mxu0 %v281
        %v391 = vpop.f32.mrb[0].mxu0
        %v392 = vadd.f32 0.0, %v391
        %v393 = vpop.f32.mrb[0].mxu0
        %394 = vmatprep.mubr.f32.mxu0 0.0
        %395 = vmatmul.mubr.f32.gmra.mrb[0].mxu0 %v282
        %v396 = vpop.f32.mrb[0].mxu0
        %v397 = vadd.f32 0.0, %v396
        %v398 = vpop.f32.mrb[0].mxu0
        %399 = vmatprep.mubr.f32.mxu0 0.0
        %400 = vmatmul.mubr.f32.gmra.mrb[0].mxu0 %v283
        %v401 = vpop.f32.mrb[0].mxu0
        %v402 = vadd.f32 0.0, %v401
        %v403 = vpop.f32.mrb[0].mxu0
        %404 = vmatprep.mubr.f32.mxu0 0.0
        %405 = vmatmul.mubr.f32.gmra.mrb[0].mxu0 %v284
        %v406 = vpop.f32.mrb[0].mxu0
        %v407 = vadd.f32 0.0, %v406
        %v408 = vpop.f32.mrb[0].mxu0
        %409 = vmatprep.mubr.f32.mxu0 0.0
        %410 = vmatmul.mubr.f32.gmra.mrb[0].mxu0 %v285
        %v411 = vpop.f32.mrb[0].mxu0
        %v412 = vadd.f32 0.0, %v411
        %v413 = vpop.f32.mrb[0].mxu0
        %414 = vmatprep.mubr.f32.mxu0 0.0
        %415 = vmatmul.mubr.f32.gmra.mrb[0].mxu0 %v286
        %v416 = vpop.f32.mrb[0].mxu0
        %v417 = vadd.f32 0.0, %v416
        %v418 = vpop.f32.mrb[0].mxu0
        %419 = vmatprep.mubr.f32.mxu0 0.0
        %420 = vmatmul.mubr.f32.gmra.mrb[0].mxu0 %v287
        %v421 = vpop.f32.mrb[0].mxu0
        %v422 = vadd.f32 0.0, %v421
        %v423 = vpop.f32.mrb[0].mxu0
        %424 = vmatprep.mubr.f32.mxu0 0.0
        %425 = vmatmul.mubr.f32.gmra.mrb[0].mxu0 %v288
        %v426 = vpop.f32.mrb[0].mxu0
        %v427 = vadd.f32 0.0, %v426
        %v428 = vpop.f32.mrb[0].mxu0
        %429 = vmatprep.mubr.f32.mxu0 0.0
        %430 = vmatmul.mubr.f32.gmra.mrb[0].mxu0 %v289
        %v431 = vpop.f32.mrb[0].mxu0
        %v432 = vadd.f32 0.0, %v431
        %v433 = vpop.f32.mrb[0].mxu0
        %434 = vmatprep.mubr.f32.mxu0 0.0
        %435 = vmatmul.mubr.f32.gmra.mrb[0].mxu0 %v290
        %v436 = vpop.f32.mrb[0].mxu0
        %v437 = vadd.f32 0.0, %v436
        %v438 = vpop.f32.mrb[0].mxu0
        %439 = vmatprep.mubr.f32.mxu0 0.0
        %440 = vmatmul.mubr.f32.gmra.mrb[0].mxu0 %v291
        %v441 = vpop.f32.mrb[0].mxu0
        %v442 = vadd.f32 0.0, %v441
        %v443 = vpop.f32.mrb[0].mxu0
        %444 = vmatprep.mubr.f32.mxu0 0.0
        %445 = vmatmul.mubr.f32.gmra.mrb[0].mxu0 %v292
        %v446 = vpop.f32.mrb[0].mxu0
        %v447 = vadd.f32 0.0, %v446
        %v448 = vpop.f32.mrb[0].mxu0
        %449 = vmatprep.mubr.f32.mxu0 0.0
        %450 = vmatmul.mubr.f32.gmra.mrb[0].mxu0 %v293
        %v451 = vpop.f32.mrb[0].mxu0
        %v452 = vadd.f32 0.0, %v451
        %v453 = vpop.f32.mrb[0].mxu0
        %454 = vmatprep.mubr.f32.mxu0 0.0
        %455 = vmatmul.mubr.f32.gmra.mrb[0].mxu0 %v294
        %v456 = vpop.f32.mrb[0].mxu0
        %v457 = vadd.f32 0.0, %v456
        %v458 = vpop.f32.mrb[0].mxu0
        %459 = vmatprep.mubr.f32.mxu0 0.0
        %460 = vmatmul.mubr.f32.gmra.mrb[0].mxu0 %v295
        %v461 = vpop.f32.mrb[0].mxu0
        %v462 = vadd.f32 0.0, %v461
        %v463 = vpop.f32.mrb[0].mxu0
        %464 = vmatprep.mubr.f32.mxu0 0.0
        %465 = vmatmul.mubr.f32.gmra.mrb[0].mxu0 %v296
        %v466 = vpop.f32.mrb[0].mxu0
        %v467 = vadd.f32 0.0, %v466
        %v468 = vpop.f32.mrb[0].mxu0
        %469 = vmatprep.mubr.f32.mxu0 0.0
        %470 = vmatmul.mubr.f32.gmra.mrb[0].mxu0 %v297
        %v471 = vpop.f32.mrb[0].mxu0
        %v472 = vadd.f32 0.0, %v471
        %v473 = vpop.f32.mrb[0].mxu0
        %474 = vmatprep.mubr.f32.mxu0 0.0
        %475 = vmatmul.mubr.f32.gmra.mrb[0].mxu0 %v298
        %v476 = vpop.f32.mrb[0].mxu0
        %v477 = vadd.f32 0.0, %v476
        %v478 = vpop.f32.mrb[0].mxu0
        %479 = vmatprep.mubr.f32.mxu0 0.0
        %480 = vmatmul.mubr.f32.gmra.mrb[0].mxu0 %v299
        %v481 = vpop.f32.mrb[0].mxu0
        %v482 = vadd.f32 0.0, %v481
        %v483 = vpop.f32.mrb[0].mxu0
        %484 = vmatprep.mubr.f32.mxu0 0.0
        %485 = vmatmul.mubr.f32.gmra.mrb[0].mxu0 %v300
        %v486 = vpop.f32.mrb[0].mxu0
        %v487 = vadd.f32 0.0, %v486
        %v488 = vpop.f32.mrb[0].mxu0
        %489 = vmatprep.mubr.f32.mxu0 0.0
        %490 = vmatmul.mubr.f32.gmra.mrb[0].mxu0 %v301
        %v491 = vpop.f32.mrb[0].mxu0
        %v492 = vadd.f32 0.0, %v491
        %v493 = vpop.f32.mrb[0].mxu0
        %494 = vmatprep.mubr.f32.mxu0 0.0
        %495 = vmatmul.mubr.f32.gmra.mrb[0].mxu0 %v302
        %v496 = vpop.f32.mrb[0].mxu0
        %v497 = vadd.f32 0.0, %v496
        %v498 = vpop.f32.mrb[0].mxu0
        %499 = vmatprep.mubr.f32.mxu0 0.0
        %500 = vmatmul.mubr.f32.gmra.mrb[0].mxu0 %v303
        %v501 = vpop.f32.mrb[0].mxu0
        %v502 = vadd.f32 0.0, %v501
        %v503 = vpop.f32.mrb[0].mxu0
        %504 = vdwg.mxu0
        %vm505 = vcmask 130048
        %506 = vst.msk [vmem:[%s278] sm:$0xff] %vm505, %v387
        %507 = vst.msk [vmem:[%s278 + $0x8] sm:$0xff] %vm505, %v392
        %508 = vst.msk [vmem:[%s278 + $0x10] sm:$0xff] %vm505, %v397
        %509 = vst.msk [vmem:[%s278 + $0x18] sm:$0xff] %vm505, %v402
        %510 = vst.msk [vmem:[%s278 + $0x20] sm:$0xff] %vm505, %v407
        %511 = vst.msk [vmem:[%s278 + $0x28] sm:$0xff] %vm505, %v412
        %512 = vst.msk [vmem:[%s278 + $0x30] sm:$0xff] %vm505, %v417
        %513 = vst.msk [vmem:[%s278 + $0x38] sm:$0xff] %vm505, %v422
        %514 = vst.msk [vmem:[%s278 + $0x40] sm:$0xff] %vm505, %v427
        %515 = vst.msk [vmem:[%s278 + $0x48] sm:$0xff] %vm505, %v432
        %516 = vst.msk [vmem:[%s278 + $0x50] sm:$0xff] %vm505, %v437
        %517 = vst.msk [vmem:[%s278 + $0x58] sm:$0xff] %vm505, %v442
        %518 = vst.msk [vmem:[%s278 + $0x60] sm:$0xff] %vm505, %v447
        %519 = vst.msk [vmem:[%s278 + $0x68] sm:$0xff] %vm505, %v452
        %520 = vst.msk [vmem:[%s278 + $0x70] sm:$0xff] %vm505, %v457
        %521 = vst.msk [vmem:[%s278 + $0x78] sm:$0xff] %vm505, %v462
        %522 = vst.msk [vmem:[%s278 + $0x80] sm:$0xff] %vm505, %v467
        %523 = vst.msk [vmem:[%s278 + $0x88] sm:$0xff] %vm505, %v472
        %524 = vst.msk [vmem:[%s278 + $0x90] sm:$0xff] %vm505, %v477
        %525 = vst.msk [vmem:[%s278 + $0x98] sm:$0xff] %vm505, %v482
        %526 = vst.msk [vmem:[%s278 + $0xa0] sm:$0xff] %vm505, %v487
        %527 = vst.msk [vmem:[%s278 + $0xa8] sm:$0xff] %vm505, %v492
        %528 = vst.msk [vmem:[%s278 + $0xb0] sm:$0xff] %vm505, %v497
        %529 = vst.msk [vmem:[%s278 + $0xb8] sm:$0xff] %vm505, %v502
        %v530 = vsel %vm505, %v387, 0.0
        %v531 = vsel %vm505, %v392, 0.0
        %v532 = vadd.f32 %v530, %v531
        %v533 = vsel %vm505, %v397, 0.0
        %v534 = vadd.f32 %v532, %v533
        %v535 = vsel %vm505, %v402, 0.0
        %v536 = vadd.f32 %v534, %v535
        %v537 = vsel %vm505, %v407, 0.0
        %v538 = vadd.f32 %v536, %v537
        %v539 = vsel %vm505, %v412, 0.0
        %v540 = vadd.f32 %v538, %v539
        %v541 = vsel %vm505, %v417, 0.0
        %v542 = vadd.f32 %v540, %v541
        %v543 = vsel %vm505, %v422, 0.0
        %v544 = vadd.f32 %v542, %v543
        %v545 = vsel %vm505, %v427, 0.0
        %v546 = vadd.f32 %v544, %v545
        %v547 = vsel %vm505, %v432, 0.0
        %v548 = vadd.f32 %v546, %v547
        %v549 = vsel %vm505, %v437, 0.0
        %v550 = vadd.f32 %v548, %v549
        %v551 = vsel %vm505, %v442, 0.0
        %v552 = vadd.f32 %v550, %v551
        %v553 = vsel %vm505, %v447, 0.0
        %v554 = vadd.f32 %v552, %v553
        %v555 = vsel %vm505, %v452, 0.0
        %v556 = vadd.f32 %v554, %v555
        %v557 = vsel %vm505, %v457, 0.0
        %v558 = vadd.f32 %v556, %v557
        %v559 = vsel %vm505, %v462, 0.0
        %v560 = vadd.f32 %v558, %v559
        %v561 = vsel %vm505, %v467, 0.0
        %v562 = vadd.f32 %v560, %v561
        %v563 = vsel %vm505, %v472, 0.0
        %v564 = vadd.f32 %v562, %v563
        %v565 = vsel %vm505, %v477, 0.0
        %v566 = vadd.f32 %v564, %v565
        %v567 = vsel %vm505, %v482, 0.0
        %v568 = vadd.f32 %v566, %v567
        %v569 = vsel %vm505, %v487, 0.0
        %v570 = vadd.f32 %v568, %v569
        %v571 = vsel %vm505, %v492, 0.0
        %v572 = vadd.f32 %v570, %v571
        %v573 = vsel %vm505, %v497, 0.0
        %v574 = vadd.f32 %v572, %v573
        %v575 = vsel %vm505, %v502, 0.0
        %v576 = vadd.f32 %v574, %v575
        %v577 = vrot.slane %v576, 4
        %v578 = vadd.f32 %v576, %v577
        %v579 = vrot.slane %v578, 2
        %v580 = vadd.f32 %v578, %v579
        %v581 = vrot.slane %v580, 1
        %v582 = vadd.f32 %v580, %v581
        %v583 = vmul.f32 %v387, %v387
        %v584 = vmul.f32 %v392, %v392
        %v585 = vmul.f32 %v397, %v397
        %v586 = vmul.f32 %v402, %v402
        %v587 = vmul.f32 %v407, %v407
        %v588 = vmul.f32 %v412, %v412
        %v589 = vmul.f32 %v417, %v417
        %v590 = vmul.f32 %v422, %v422
        %v591 = vmul.f32 %v427, %v427
        %v592 = vmul.f32 %v432, %v432
        %v593 = vmul.f32 %v437, %v437
        %v594 = vmul.f32 %v442, %v442
        %v595 = vmul.f32 %v447, %v447
        %v596 = vmul.f32 %v452, %v452
        %v597 = vmul.f32 %v457, %v457
        %v598 = vmul.f32 %v462, %v462
        %v599 = vmul.f32 %v467, %v467
        %v600 = vmul.f32 %v472, %v472
        %v601 = vmul.f32 %v477, %v477
        %v602 = vmul.f32 %v482, %v482
        %v603 = vmul.f32 %v487, %v487
        %v604 = vmul.f32 %v492, %v492
        %v605 = vmul.f32 %v497, %v497
        %v606 = vmul.f32 %v502, %v502
        %v607 = vsel %vm505, %v583, 0.0
        %v608 = vsel %vm505, %v584, 0.0
        %v609 = vadd.f32 %v607, %v608
        %v610 = vsel %vm505, %v585, 0.0
        %v611 = vadd.f32 %v609, %v610
        %v612 = vsel %vm505, %v586, 0.0
        %v613 = vadd.f32 %v611, %v612
        %v614 = vsel %vm505, %v587, 0.0
        %v615 = vadd.f32 %v613, %v614
        %v616 = vsel %vm505, %v588, 0.0
        %v617 = vadd.f32 %v615, %v616
        %v618 = vsel %vm505, %v589, 0.0
        %v619 = vadd.f32 %v617, %v618
        %v620 = vsel %vm505, %v590, 0.0
        %v621 = vadd.f32 %v619, %v620
        %v622 = vsel %vm505, %v591, 0.0
        %v623 = vadd.f32 %v621, %v622
        %v624 = vsel %vm505, %v592, 0.0
        %v625 = vadd.f32 %v623, %v624
        %v626 = vsel %vm505, %v593, 0.0
        %v627 = vadd.f32 %v625, %v626
        %v628 = vsel %vm505, %v594, 0.0
        %v629 = vadd.f32 %v627, %v628
        %v630 = vsel %vm505, %v595, 0.0
        %v631 = vadd.f32 %v629, %v630
        %v632 = vsel %vm505, %v596, 0.0
        %v633 = vadd.f32 %v631, %v632
        %v634 = vsel %vm505, %v597, 0.0
        %v635 = vadd.f32 %v633, %v634
        %v636 = vsel %vm505, %v598, 0.0
        %v637 = vadd.f32 %v635, %v636
        %v638 = vsel %vm505, %v599, 0.0
        %v639 = vadd.f32 %v637, %v638
        %v640 = vsel %vm505, %v600, 0.0
        %v641 = vadd.f32 %v639, %v640
        %v642 = vsel %vm505, %v601, 0.0
        %v643 = vadd.f32 %v641, %v642
        %v644 = vsel %vm505, %v602, 0.0
        %v645 = vadd.f32 %v643, %v644
        %v646 = vsel %vm505, %v603, 0.0
        %v647 = vadd.f32 %v645, %v646
        %v648 = vsel %vm505, %v604, 0.0
        %v649 = vadd.f32 %v647, %v648
        %v650 = vsel %vm505, %v605, 0.0
        %v651 = vadd.f32 %v649, %v650
        %v652 = vsel %vm505, %v606, 0.0
        %v653 = vadd.f32 %v651, %v652
        %v654 = vrot.slane %v653, 4
        %v655 = vadd.f32 %v653, %v654
        %v656 = vrot.slane %v655, 2
        %v657 = vadd.f32 %v655, %v656
        %v658 = vrot.slane %v657, 1
        %v659 = vadd.f32 %v657, %v658
        %vm660 = vcmask 122880
        %661 = vst.msk [vmem:[%s259] sm:$0x1] %vm660, %v582
        %662 = vst.msk [vmem:[%s265] sm:$0x1] %vm660, %v659
        %s663 = smul.u32 24, %s29
        %p664 = scmp.lt.s32.totalorder %s663, 47
        %s665 = scalar_select %p664, %s663, 47
        %p666 = scmp.lt.s32.totalorder %s30, 0
        %s667 = scalar_select %p666, %s30, 0
        %s668 = sadd.s32 %s667, %s665
        %s669 = smul.addr %s668, 8
        %s670 = scalar_lea.vmem %s2, %s669
        %s671 = sand.u32 %s127, 1
        %s672 = scalar_lea.sflag [#allocation4], %s671
        %s673 = sand.u32 %s127, 1
        %s674 = scalar_lea.vmem [#allocation5], %s673
        %s675 = sand.u32 %s155, 1
        %s676 = scalar_lea.sflag [#allocation7], %s675
        %s677 = sand.u32 %s155, 1
        %s678 = scalar_lea.vmem [#allocation6], %s677
        // Predicated region
        $region33: #{tpu_custom_call.1} parent=27 // pred_check
          %p679 = pneg %p109
        $region34: #{tpu_custom_call.1} parent=27 // pred_check_branch
          %681 = sbr.rel (%p679) target = $region36
        $region35: #{tpu_custom_call.1} parent=27 // pred_region
          %s682 = smul.u32 24, %s29
        $region36: #{tpu_custom_call.1} parent=27 // pred_fallthru
          _
        // Predicated region
        $region37: #{tpu_custom_call.1} parent=27 // pred_check
          %p683 = pneg %p137
        $region38: #{tpu_custom_call.1} parent=27 // pred_check_branch
          %685 = sbr.rel (%p683) target = $region40
        $region39: #{tpu_custom_call.1} parent=27 // pred_region
          %s687 = ssub.s32 16, 16
          %688 = vsyncadd %s672, %s687
          %s689 = sadd.s32 %s30, %s29
          %s690 = smul.addr %s689, 16
          %s691 = scalar_lea.hbm %s3, %s690
          %s693 = sshll.u32 %s674, 4
          %s694 = int_to_ptr.vmem [resolvable:$true] %s693
          %696 = dma.vmem_to_hbm [thread:$0]  %s694, 16, %s691, %s672
        $region40: #{tpu_custom_call.1} parent=27 // pred_fallthru
          _
        // Predicated region
        $region41: #{tpu_custom_call.1} parent=27 // pred_check
          %p697 = pneg %p165
        $region42: #{tpu_custom_call.1} parent=27 // pred_check_branch
          %699 = sbr.rel (%p697) target = $region44
        $region43: #{tpu_custom_call.1} parent=27 // pred_region
          %s701 = ssub.s32 16, 16
          %702 = vsyncadd %s676, %s701
          %s703 = sadd.s32 %s30, %s29
          %s704 = smul.addr %s703, 16
          %s705 = scalar_lea.hbm %s4, %s704
          %s707 = sshll.u32 %s678, 4
          %s708 = int_to_ptr.vmem [resolvable:$true] %s707
          %710 = dma.vmem_to_hbm [thread:$0]  %s708, 16, %s705, %s676
        $region44: #{tpu_custom_call.1} parent=27 // pred_fallthru
          _
      $region28: #{tpu_custom_call.1} parent=5 // pred_fallthru
        _
      %p711 = scmp.le.s32.totalorder 2, %s20
      // Predicated region
      $region45: #{tpu_custom_call.1} parent=5 // pred_check
        %p712 = pneg %p711
      $region46: #{tpu_custom_call.1} parent=5 // pred_check_branch
        %714 = sbr.rel (%p712) target = $region48
      $region47: #{tpu_custom_call.1} parent=5 // pred_region
        %s715 = ssub.s32 %s20, 2
        // Predicated region
        $region49: #{tpu_custom_call.1} parent=47 // pred_check
          %p716 = pneg %p115
        $region50: #{tpu_custom_call.1} parent=47 // pred_check_branch
          %718 = sbr.rel (%p716) target = $region52
        $region51: #{tpu_custom_call.1} parent=47 // pred_region
          %s719 = smul.u32 24, %s31
          %p720 = scmp.lt.s32.totalorder %s719, 47
          %s721 = scalar_select %p720, %s719, 47
          %p722 = scmp.lt.s32.totalorder %s32, 0
          %s723 = scalar_select %p722, %s32, 0
          %s724 = sadd.s32 %s723, %s721
          %s725 = smul.addr %s724, 8
          %s726 = scalar_lea.vmem %s2, %s725
        $region52: #{tpu_custom_call.1} parent=47 // pred_fallthru
          _
        // Predicated region
        $region53: #{tpu_custom_call.1} parent=47 // pred_check
          %p727 = pneg %p143
        $region54: #{tpu_custom_call.1} parent=47 // pred_check_branch
          %729 = sbr.rel (%p727) target = $region56
        $region55: #{tpu_custom_call.1} parent=47 // pred_region
          %s730 = sand.u32 %s128, 1
          %s731 = scalar_lea.sflag [#allocation4], %s730
          %s732 = sand.u32 %s128, 1
          %s733 = scalar_lea.vmem [#allocation5], %s732
          %734 = dma.done %s731, 16
        $region56: #{tpu_custom_call.1} parent=47 // pred_fallthru
          _
        // Predicated region
        $region57: #{tpu_custom_call.1} parent=47 // pred_check
          %p735 = pneg %p171
        $region58: #{tpu_custom_call.1} parent=47 // pred_check_branch
          %737 = sbr.rel (%p735) target = $region60
        $region59: #{tpu_custom_call.1} parent=47 // pred_region
          %s738 = sand.u32 %s156, 1
          %s739 = scalar_lea.sflag [#allocation7], %s738
          %s740 = sand.u32 %s156, 1
          %s741 = scalar_lea.vmem [#allocation6], %s740
          %742 = dma.done %s739, 16
        $region60: #{tpu_custom_call.1} parent=47 // pred_fallthru
          _
      $region48: #{tpu_custom_call.1} parent=5 // pred_fallthru
        _
    $region6: #{tpu_custom_call.1} parent=1 // loop_footer
      %s24 = sadd.s32 1, %s20
    $region7: #{tpu_custom_call.1} parent=1 // loop_footer_branch
      %19 = sbr.rel target = $region3
    $region8: #{tpu_custom_call.1} parent=1 // loop_exit
      _
    %743 = vsyncpa [#allocation3], 1
    %s744 = scalar_lea.sflag [#allocation3], 1
    %745 = vsyncpa %s744, 1
    %746 = vsyncpa [#allocation4], 1
    %s747 = scalar_lea.sflag [#allocation4], 1
    %748 = vsyncpa %s747, 1
    %749 = vsyncpa [#allocation7], 1
    %s750 = scalar_lea.sflag [#allocation7], 1
    %751 = vsyncpa %s750, 1

</llo_original>
